<compile_context>
chip_gen: v6e
topology: v6e:2x2x1
jax: 0.10.0
libtpu: 0.0.40
codegen_flags: <defaults>
</compile_context>

<pallas_src>
import jax
import jax.numpy as jnp
from jax.experimental import pallas as pl
from jax.experimental.pallas import tpu as pltpu


def _time_encoder_simple_kernel(x_ref, t_ref, o_ref):
    # x_ref: (TB, S), t_ref: (TB, 1), o_ref: (TB, S + 1)
    S = x_ref.shape[1]
    # Bulk copy of the x tile: lane offset 0, so all full 128-lane chunks lower
    # to unmasked vst; only the final partial chunk (if S % 128 != 0) is masked.
    o_ref[:, :S] = x_ref[...]
    # Single 1-lane masked store for the time column.
    o_ref[:, S:] = t_ref[...]


def _row_tile(B: int, S: int, itemsize: int, vmem_budget_bytes: int = 8 << 20) -> int:
    """Pick a batch-row tile so double-buffered in+out blocks stay ~8 MiB.

    8 MiB is comfortably below the scoped-VMEM defaults of every generation
    (16 MiB v5e, 32 MiB v6e/v7x) and well under v7x's 64 MiB physical VMEM,
    while 512-1024 rows is already enough to reach ~85% of HBM bandwidth for a
    memory-bound copy kernel.
    """
    # bytes per row: x tile (S) + t tile (1) + out tile (S + 1), double-buffered.
    bytes_per_row = (2 * S + 2) * itemsize * 2
    tb = vmem_budget_bytes // max(1, bytes_per_row)
    tb = min(tb, 1024)
    tb = (tb // 8) * 8          # sublane (second-to-last dim) alignment
    if tb <= 0 or tb >= B:
        return B                # single full-dim block is always a legal shape
    return max(8, tb)


def time_encoder_simple(x: jax.Array, t: jax.Array) -> jax.Array:
    """Pallas equivalent of TimeEncoder_Simple.forward(x, t).

    x: (B, S); t: (B,) or (B, 1); returns (B, S + 1) = cat((x, t.view(B, 1)), 1).
    """
    B, S = x.shape
    et = t.reshape(B, 1).astype(x.dtype)   # mirrors t.view(B, 1)

    TB = _row_tile(B, S, jnp.dtype(x.dtype).itemsize)
    grid = (pl.cdiv(B, TB),)

    return pl.pallas_call(
        _time_encoder_simple_kernel,
        out_shape=jax.ShapeDtypeStruct((B, S + 1), x.dtype),
        grid=grid,
        in_specs=[
            pl.BlockSpec((TB, S), lambda i: (i, 0)),
            pl.BlockSpec((TB, 1), lambda i: (i, 0)),
        ],
        out_specs=pl.BlockSpec((TB, S + 1), lambda i: (i, 0)),
        compiler_params=pltpu.CompilerParams(
            # Batch tiles are independent: shard the grid across both
            # TensorCores on v7x (harmless no-op on single-TC v5e/v6e).
            dimension_semantics=("parallel",),
            # Allow large pipelined blocks even on v5e's 16 MiB default;
            # still leaves plenty of headroom under v7x's 64 MiB physical VMEM.
            vmem_limit_bytes=32 << 20,
        ),
    )(x, et)


if __name__ == "__main__":
    # TimeEncoder_Simple has no parameters, so nothing to initialize.
    key = jax.random.PRNGKey(0)
    kx, kt = jax.random.split(key)

    # Small shapes implied by forward(x: (B, S), t: (B,)).
    B, S = 2, 8
    x = jax.random.normal(kx, (B, S), dtype=jnp.float32)
    t = jax.random.normal(kt, (B,), dtype=jnp.float32)

    out = jax.block_until_ready(time_encoder_simple(x, t))
    ref = jnp.concatenate([x, t.reshape(B, 1)], axis=1)
    assert out.shape == (B, S + 1), out.shape
    assert jnp.allclose(out, ref), "mismatch vs reference concat (small)"

    # Also exercise the tiled, multi-block, megacore-parallel grid path.
    B2, S2 = 2048, 256
    kx2, kt2 = jax.random.split(jax.random.PRNGKey(1))
    x2 = jax.random.normal(kx2, (B2, S2), dtype=jnp.float32)
    t2 = jax.random.normal(kt2, (B2,), dtype=jnp.float32)
    out2 = jax.block_until_ready(time_encoder_simple(x2, t2))
    ref2 = jnp.concatenate([x2, t2.reshape(B2, 1)], axis=1)
    assert out2.shape == (B2, S2 + 1), out2.shape
    assert jnp.allclose(out2, ref2), "mismatch vs reference concat (tiled)"

    print("KERNEL_OK")
</pallas_src>

<mosaic_0001>
module attributes {stable_mosaic.version = 11 : i64} {
  func.func @_time_encoder_simple_kernel(%arg0: i32, %arg1: memref<2x8xf32, #tpu.memory_space<vmem>>, %arg2: memref<2x1xf32, #tpu.memory_space<vmem>>, %arg3: memref<2x9xf32, #tpu.memory_space<vmem>>) attributes {dimension_semantics = [#tpu.dimension_semantics<parallel>], iteration_bounds = array<i64: 1>, scalar_prefetch = 0 : i64, scratch_operands = 0 : i64, tpu.core_type = #tpu.core_type<tc>, window_params = [{transform_indices = @transform_0, window_bounds = array<i64: 2, 8>}, {transform_indices = @transform_1, window_bounds = array<i64: 2, 1>}, {transform_indices = @transform_2, window_bounds = array<i64: 2, 9>}]} {
    %c0 = arith.constant 0 : index
    %c0_0 = arith.constant 0 : index
    %0 = vector.load %arg1[%c0, %c0_0] : memref<2x8xf32, #tpu.memory_space<vmem>>, vector<2x8xf32>
    %c0_1 = arith.constant 0 : index
    %c0_2 = arith.constant 0 : index
    %1 = vector.load %arg3[%c0_1, %c0_2] : memref<2x9xf32, #tpu.memory_space<vmem>>, vector<2x8xf32>
    tpu.vector_store %arg3[%c0_1, %c0_2], %0 {strides = array<i32>} : memref<2x9xf32, #tpu.memory_space<vmem>>, vector<2x8xf32>,
    %c0_3 = arith.constant 0 : index
    %c0_4 = arith.constant 0 : index
    %2 = vector.load %arg2[%c0_3, %c0_4] : memref<2x1xf32, #tpu.memory_space<vmem>>, vector<2x1xf32>
    %c0_5 = arith.constant 0 : index
    %c8 = arith.constant 8 : index
    %3 = vector.load %arg3[%c0_5, %c8] : memref<2x9xf32, #tpu.memory_space<vmem>>, vector<2x1xf32>
    tpu.vector_store %arg3[%c0_5, %c8], %2 {strides = array<i32>} : memref<2x9xf32, #tpu.memory_space<vmem>>, vector<2x1xf32>,
    return
  }
  func.func @transform_0(%arg0: i32) -> (i32, i32) {
    %c0_i32 = arith.constant 0 : i32
    %c0_i32_0 = arith.constant 0 : i32
    return %arg0, %c0_i32 : i32, i32
  }
  func.func @transform_1(%arg0: i32) -> (i32, i32) {
    %c0_i32 = arith.constant 0 : i32
    %c0_i32_0 = arith.constant 0 : i32
    return %arg0, %c0_i32 : i32, i32
  }
  func.func @transform_2(%arg0: i32) -> (i32, i32) {
    %c0_i32 = arith.constant 0 : i32
    %c0_i32_0 = arith.constant 0 : i32
    return %arg0, %c0_i32 : i32, i32
  }
}

</mosaic_0001>

<llo_original>
// kernel: tpu_custom_call.1
$region0: #{tpu_custom_call.1}
  #allocation0 [shape = 'u32[]', space=smem, size = 0x4, offset = 0x4, fixed_abs, tag = 'smem constant byte address 0x4 - core index']
  #allocation1 [shape = 'u32[144,128]{1,0:T(1,128)}', space=vmem, size = 0x12000, scoped, tag = 'internal scratch']
  %s0 = inlined_call_operand.vmem [shape: f32[2,8], index: 0, kind: input, shape index: {}]
  %s1 = inlined_call_operand.vmem [shape: f32[2,1], index: 1, kind: input, shape index: {}]
  %s2 = inlined_call_operand.hbm [shape: f32[2,9], index: 2, kind: output, shape index: {}]
  %s3 = sld [smem:[#allocation0]]
  $region18: #{tpu_custom_call.1} parent=0
    _
  %s5 = ssub.s32 1, %s3
  %s6 = scalar_select 0, %s5, %s3
  $region1: #{tpu_custom_call.1} parent=0
    #allocation2 [shape = 'u8[1024]{0}', space=vmem, size = 0x400, scoped, tag = 'output window, operand 0, single buffered']
    #allocation3 [shape = 's32[1]{0}', space=sflag, size = 0x4, scoped, tag = 'scoped memory for tpu_custom_call.1']
    %7 = vsyncpa [#allocation3], 0
    // Predicated region
    $region2: #{tpu_custom_call.1} parent=1 // pred_check
      _
    $region3: #{tpu_custom_call.1} parent=1 // pred_check_branch
      %9 = sbr.rel (0) target = $region5
    $region4: #{tpu_custom_call.1} parent=1 // pred_region
      _
    $region5: #{tpu_custom_call.1} parent=1 // pred_fallthru
      _
    // Predicated region
    $region6: #{tpu_custom_call.1} parent=1 // pred_check
      _
    $region7: #{tpu_custom_call.1} parent=1 // pred_check_branch
      %11 = sbr.rel (0) target = $region9
    $region8: #{tpu_custom_call.1} parent=1 // pred_region
      _
    $region9: #{tpu_custom_call.1} parent=1 // pred_fallthru
      _
    %v12 = vld [vmem:[%s0] sm:$0x3]
    %vm13 = vcmask 58368
    %14 = vst.msk [vmem:[#allocation2] sm:$0x3] %vm13, %v12
    %v15 = vld [vmem:[%s1] sm:$0x3]
    %17 = vrot.lane.b32.xlu0 %v15, 8
    %v18 = vpop.permute.xlu0 %17
    %vm20 = vcmask 66624
    %21 = vst.msk [vmem:[#allocation2] sm:$0x3] %vm20, %v18
    // Predicated region
    $region10: #{tpu_custom_call.1} parent=1 // pred_check
      _
    $region11: #{tpu_custom_call.1} parent=1 // pred_check_branch
      %23 = sbr.rel (0) target = $region13
    $region12: #{tpu_custom_call.1} parent=1 // pred_region
      %s25 = ssub.s32 32, 32
      %26 = vsyncadd [#allocation3], %s25
      %s28 = sshll.u32 [#allocation2], 4
      %s29 = int_to_ptr.vmem [resolvable:$true] %s28
      %31 = dma.vmem_to_hbm [thread:$0]  %s29, 32, %s2, [#allocation3]
    $region13: #{tpu_custom_call.1} parent=1 // pred_fallthru
      _
    // Predicated region
    $region14: #{tpu_custom_call.1} parent=1 // pred_check
      _
    $region15: #{tpu_custom_call.1} parent=1 // pred_check_branch
      %33 = sbr.rel (0) target = $region17
    $region16: #{tpu_custom_call.1} parent=1 // pred_region
      %34 = dma.done [#allocation3], 32
    $region17: #{tpu_custom_call.1} parent=1 // pred_fallthru
      _
    %35 = vsyncpa [#allocation3], 1

</llo_original>
